<compile_context>
chip_gen: v5e
topology: v5e:2x2
jax: 0.10.0
libtpu: 0.0.40
codegen_flags: <defaults>
</compile_context>

<pallas_src>
import functools

import jax
import jax.numpy as jnp
from jax.experimental import pallas as pl
from jax.experimental.pallas import tpu as pltpu

TIME_STEP = 35  # matches `time_step = 35` in the reference

# Raised scoped-VMEM limit: safe on v5e/v6e (128 MiB physical) and v7x (64 MiB/TC).
_VMEM_LIMIT_BYTES = 48 * 1024 * 1024


def _round_up(x, m):
    return ((x + m - 1) // m) * m


def _choose_tiles(n, d, v, in_bytes, usable_vmem):
    """Pick (tm, tv) fitting the VMEM budget.

    Budget model: double-buffered h + weight panels (+ bias) plus ~3 f32 (tm, tv)
    temporaries (logits tile, exp, reduction temps).
    Row tile has priority (weight HBM traffic ~ 1/tm); both stay MXU-friendly.
    """
    n8 = _round_up(max(n, 1), 8)
    tm_cands = [t for t in (1024, 768, 512, 256, 128, 64, 32, 16, 8) if t <= n8] or [n8]
    tv_cands = [t for t in (2048, 1024, 512, 256, 128) if t <= _round_up(max(v, 1), 128)] or [128]
    for tm in tm_cands:
        # Keep >= 2 row tiles when the problem is big enough so "parallel" rows can
        # actually split across the two TensorCores (v7x megacore).
        if n8 > 16 and tm > n8 // 2:
            continue
        for tv in tv_cands:
            need = (2 * (tm + tv) * d * in_bytes      # double-buffered h + W panels
                    + 3 * tm * tv * 4                 # f32 logits tile + temporaries
                    + 2 * 2 * tv * 4)                 # bias panel (double-buffered)
            if need <= usable_vmem:
                return tm, tv
    return tm_cands[-1], tv_cands[-1]


def lse_kernel(h_ref, w_ref, b_ref, out_ref, m_sc, l_sc):
    """Per-row online logsumexp over vocab tiles. Grid = (row tiles, vocab tiles)."""
    j = pl.program_id(1)  # vocab-tile index (reduction axis, last)

    @pl.when(j == 0)
    def _init():
        m_sc[...] = jnp.full_like(m_sc, -jnp.inf)
        l_sc[...] = jnp.zeros_like(l_sc)

    # (tm, D) x (D, tv) -> (tm, tv); bf16 inputs, f32 accumulation on the MXU.
    logits = jnp.dot(h_ref[...], w_ref[...],
                     preferred_element_type=jnp.float32) + b_ref[...]

    m_prev = m_sc[...]
    m_new = jnp.maximum(m_prev, jnp.max(logits, axis=-1, keepdims=True))
    l_sc[...] = l_sc[...] * jnp.exp(m_prev - m_new) + jnp.sum(
        jnp.exp(logits - m_new), axis=-1, keepdims=True)
    m_sc[...] = m_new

    @pl.when(j == pl.num_programs(1) - 1)
    def _finalize():
        out_ref[...] = m_sc[...] + jnp.log(l_sc[...])


@functools.partial(jax.jit, static_argnames=("compute_dtype",))
def nll_loss(h, weight, bias, word_embed, compute_dtype=jnp.bfloat16):
    """h: (N, D) f32; weight: (V, D) f32; bias: (V,) f32; word_embed: (TIME_STEP+N,) int."""
    n, d = h.shape
    v = weight.shape[0]
    in_bytes = jnp.dtype(compute_dtype).itemsize

    tm, tv = _choose_tiles(n, d, v, in_bytes, int(0.8 * _VMEM_LIMIT_BYTES))
    n_pad = _round_up(n, tm)
    v_pad = _round_up(v, tv)

    # --- input prep (one-time HBM work, amortized over all row tiles) -----------
    h_c = h.astype(compute_dtype)
    if n_pad > n:
        h_c = jnp.pad(h_c, ((0, n_pad - n), (0, 0)))          # zero rows, discarded later
    w_t = weight.astype(compute_dtype).T                       # (D, V): canonical MXU layout
    bias_p = bias.astype(jnp.float32)
    if v_pad > v:
        w_t = jnp.pad(w_t, ((0, 0), (0, v_pad - v)))
        # Finite large-negative bias for pad classes (NOT -inf: an all--inf tile would
        # produce exp(-inf - (-inf)) = NaN in the online update).
        bias_p = jnp.pad(bias_p, (0, v_pad - v), constant_values=-1e30)
    b2 = bias_p.reshape(1, v_pad)

    grid = (n_pad // tm, v_pad // tv)

    lse = pl.pallas_call(
        lse_kernel,
        out_shape=jax.ShapeDtypeStruct((n_pad, 1), jnp.float32),
        grid_spec=pltpu.PrefetchScalarGridSpec(
            num_scalar_prefetch=0,
            grid=grid,
            in_specs=[
                pl.BlockSpec((tm, d), lambda i, j: (i, 0)),    # h rows        (bf16)
                pl.BlockSpec((d, tv), lambda i, j: (0, j)),    # W^T panel     (bf16)
                pl.BlockSpec((1, tv), lambda i, j: (0, j)),    # bias panel    (f32)
            ],
            out_specs=pl.BlockSpec((tm, 1), lambda i, j: (i, 0)),
            scratch_shapes=[
                pltpu.VMEM((tm, 1), jnp.float32),   # running max m
                pltpu.VMEM((tm, 1), jnp.float32),   # running sum-exp l
            ],
        ),
        compiler_params=pltpu.CompilerParams(
            dimension_semantics=("parallel", "arbitrary"),
            vmem_limit_bytes=_VMEM_LIMIT_BYTES,
        ),
    )(h_c, w_t, b2)

    # --- target-logit gather, hoisted out of the vocab loop (per review) --------
    # Touches only N rows of W; done in plain JAX. Uses the same bf16-cast inputs as
    # the kernel's matmul so (lse - t_logit) is one consistent softmax.
    # TODO(synk): CrossEntropyLoss's default ignore_index (-100) is not supported;
    # targets are assumed to always be valid class ids.
    tgt = word_embed[TIME_STEP:].astype(jnp.int32)
    w_rows = jnp.take(weight, tgt, axis=0).astype(compute_dtype).astype(jnp.float32)
    h32 = h.astype(compute_dtype).astype(jnp.float32)
    t_logit = jnp.sum(h32 * w_rows, axis=-1) + bias.astype(jnp.float32)[tgt]

    # sum reduction of CrossEntropyLoss(size_average=False); padded rows are dropped.
    return jnp.sum(lse[:n, 0] - t_logit)


if __name__ == "__main__":
    key = jax.random.PRNGKey(0)

    # Deterministic synthetic "vocab" (stands in for len(id2word)) and parameters.
    id2word = [f"w{i}" for i in range(128)]
    V = len(id2word)          # 128
    in_features = 32
    N = 8                     # batch size; word_embed has TIME_STEP + N labels

    k1, k2, k3, k4 = jax.random.split(key, 4)
    weight = jax.random.normal(k1, (V, in_features), jnp.float32) * 0.02
    bias = jax.random.normal(k2, (V,), jnp.float32) * 0.02
    h = jax.random.normal(k3, (N, in_features), jnp.float32)
    word_embed = jax.random.randint(k4, (TIME_STEP + N,), 0, V, dtype=jnp.int32)

    loss = nll_loss(h, weight, bias, word_embed)
    loss = jax.block_until_ready(loss)

    # Reference 1: identical math with the same bf16-cast inputs (tight tolerance).
    tgt = word_embed[TIME_STEP:]
    h_bf = h.astype(jnp.bfloat16).astype(jnp.float32)
    w_bf = weight.astype(jnp.bfloat16).astype(jnp.float32)
    logits_bf = h_bf @ w_bf.T + bias
    ref_bf = -jnp.sum(jax.nn.log_softmax(logits_bf, axis=-1)[jnp.arange(N), tgt])
    assert jnp.allclose(loss, ref_bf, rtol=1e-4, atol=1e-3), (loss, ref_bf)

    # Reference 2: full-f32 PyTorch semantics (loose tolerance, bf16 streaming).
    logits_f32 = h @ weight.T + bias
    ref_f32 = -jnp.sum(jax.nn.log_softmax(logits_f32, axis=-1)[jnp.arange(N), tgt])
    assert jnp.allclose(loss, ref_f32, rtol=2e-2, atol=2e-2), (loss, ref_f32)

    print("KERNEL_OK")
</pallas_src>

<mosaic_0001>
module attributes {stable_mosaic.version = 11 : i64} {
  func.func @lse_kernel(%arg0: i32, %arg1: i32, %arg2: memref<8x32xbf16, #tpu.memory_space<vmem>>, %arg3: memref<32x128xbf16, #tpu.memory_space<vmem>>, %arg4: memref<1x128xf32, #tpu.memory_space<vmem>>, %arg5: memref<8x1xf32, #tpu.memory_space<vmem>>, %arg6: memref<8x1xf32, #tpu.memory_space<vmem>>, %arg7: memref<8x1xf32, #tpu.memory_space<vmem>>) attributes {dimension_semantics = [#tpu.dimension_semantics<parallel>, #tpu.dimension_semantics<arbitrary>], iteration_bounds = array<i64: 1, 1>, scalar_prefetch = 0 : i64, scratch_operands = 2 : i64, tpu.core_type = #tpu.core_type<tc>, window_params = [{transform_indices = @transform_0, window_bounds = array<i64: 8, 32>}, {transform_indices = @transform_1, window_bounds = array<i64: 32, 128>}, {transform_indices = @transform_2, window_bounds = array<i64: 1, 128>}, {transform_indices = @transform_3, window_bounds = array<i64: 8, 1>}]} {
    %c0_i32 = arith.constant 0 : i32
    %0 = arith.cmpi eq, %arg1, %c0_i32 : i32
    %1 = arith.extui %0 : i1 to i32
    %c0_i32_0 = arith.constant 0 : i32
    %2 = arith.cmpi ne, %1, %c0_i32_0 : i32
    scf.if %2 {
      %cst_18 = arith.constant 0xFF800000 : f32
      %28 = vector.broadcast %cst_18 : f32 to vector<8x1xf32>
      %c0_19 = arith.constant 0 : index
      %c0_20 = arith.constant 0 : index
      %29 = vector.load %arg6[%c0_19, %c0_20] : memref<8x1xf32, #tpu.memory_space<vmem>>, vector<8x1xf32>
      tpu.vector_store %arg6[%c0_19, %c0_20], %28 {strides = array<i32>} : memref<8x1xf32, #tpu.memory_space<vmem>>, vector<8x1xf32>,
      %cst_21 = arith.constant 0.000000e+00 : f32
      %30 = vector.broadcast %cst_21 : f32 to vector<8x1xf32>
      %c0_22 = arith.constant 0 : index
      %c0_23 = arith.constant 0 : index
      %31 = vector.load %arg7[%c0_22, %c0_23] : memref<8x1xf32, #tpu.memory_space<vmem>>, vector<8x1xf32>
      tpu.vector_store %arg7[%c0_22, %c0_23], %30 {strides = array<i32>} : memref<8x1xf32, #tpu.memory_space<vmem>>, vector<8x1xf32>,
    } else {
    }
    %c0 = arith.constant 0 : index
    %c0_1 = arith.constant 0 : index
    %3 = vector.load %arg2[%c0, %c0_1] : memref<8x32xbf16, #tpu.memory_space<vmem>>, vector<8x32xbf16>
    %c0_2 = arith.constant 0 : index
    %c0_3 = arith.constant 0 : index
    %4 = vector.load %arg3[%c0_2, %c0_3] : memref<32x128xbf16, #tpu.memory_space<vmem>>, vector<32x128xbf16>
    %cst = arith.constant dense<0.000000e+00> : vector<8x128xf32>
    %5 = tpu.matmul %3, %4, %cst {dimension_numbers = #tpu.dot_dimension_numbers<[1], [0], [0], [1], [0, 0, 1, 1], [], []>} : vector<8x32xbf16>, vector<32x128xbf16>, vector<8x128xf32> -> vector<8x128xf32>
    %c0_4 = arith.constant 0 : index
    %c0_5 = arith.constant 0 : index
    %6 = vector.load %arg4[%c0_4, %c0_5] : memref<1x128xf32, #tpu.memory_space<vmem>>, vector<1x128xf32>
    %7 = vector.broadcast %6 : vector<1x128xf32> to vector<8x128xf32>
    %8 = arith.addf %5, %7 : vector<8x128xf32>
    %c0_6 = arith.constant 0 : index
    %c0_7 = arith.constant 0 : index
    %9 = vector.load %arg6[%c0_6, %c0_7] : memref<8x1xf32, #tpu.memory_space<vmem>>, vector<8x1xf32>
    %cst_8 = arith.constant dense<0xFF800000> : vector<8xf32>
    %10 = vector.multi_reduction <maximumf>, %8, %cst_8 [1] : vector<8x128xf32> to vector<8xf32>
    %11 = vector.shape_cast %10 : vector<8xf32> to vector<8x1xf32>
    %12 = arith.maximumf %9, %11 : vector<8x1xf32>
    %c0_9 = arith.constant 0 : index
    %c0_10 = arith.constant 0 : index
    %13 = vector.load %arg7[%c0_9, %c0_10] : memref<8x1xf32, #tpu.memory_space<vmem>>, vector<8x1xf32>
    %14 = arith.subf %9, %12 : vector<8x1xf32>
    %15 = math.exp %14 : vector<8x1xf32>
    %16 = arith.mulf %13, %15 : vector<8x1xf32>
    %17 = vector.broadcast %12 : vector<8x1xf32> to vector<8x128xf32>
    %18 = arith.subf %8, %17 : vector<8x128xf32>
    %19 = math.exp %18 : vector<8x128xf32>
    %cst_11 = arith.constant dense<0.000000e+00> : vector<8xf32>
    %20 = vector.multi_reduction <add>, %19, %cst_11 [1] : vector<8x128xf32> to vector<8xf32>
    %21 = vector.shape_cast %20 : vector<8xf32> to vector<8x1xf32>
    %22 = arith.addf %16, %21 : vector<8x1xf32>
    %c0_12 = arith.constant 0 : index
    %c0_13 = arith.constant 0 : index
    %23 = vector.load %arg7[%c0_12, %c0_13] : memref<8x1xf32, #tpu.memory_space<vmem>>, vector<8x1xf32>
    tpu.vector_store %arg7[%c0_12, %c0_13], %22 {strides = array<i32>} : memref<8x1xf32, #tpu.memory_space<vmem>>, vector<8x1xf32>,
    %c0_14 = arith.constant 0 : index
    %c0_15 = arith.constant 0 : index
    %24 = vector.load %arg6[%c0_14, %c0_15] : memref<8x1xf32, #tpu.memory_space<vmem>>, vector<8x1xf32>
    tpu.vector_store %arg6[%c0_14, %c0_15], %12 {strides = array<i32>} : memref<8x1xf32, #tpu.memory_space<vmem>>, vector<8x1xf32>,
    %c0_i32_16 = arith.constant 0 : i32
    %25 = arith.cmpi eq, %arg1, %c0_i32_16 : i32
    %26 = arith.extui %25 : i1 to i32
    %c0_i32_17 = arith.constant 0 : i32
    %27 = arith.cmpi ne, %26, %c0_i32_17 : i32
    scf.if %27 {
      %c0_18 = arith.constant 0 : index
      %c0_19 = arith.constant 0 : index
      %28 = vector.load %arg6[%c0_18, %c0_19] : memref<8x1xf32, #tpu.memory_space<vmem>>, vector<8x1xf32>
      %c0_20 = arith.constant 0 : index
      %c0_21 = arith.constant 0 : index
      %29 = vector.load %arg7[%c0_20, %c0_21] : memref<8x1xf32, #tpu.memory_space<vmem>>, vector<8x1xf32>
      %30 = math.log %29 : vector<8x1xf32>
      %31 = arith.addf %28, %30 : vector<8x1xf32>
      %c0_22 = arith.constant 0 : index
      %c0_23 = arith.constant 0 : index
      %32 = vector.load %arg5[%c0_22, %c0_23] : memref<8x1xf32, #tpu.memory_space<vmem>>, vector<8x1xf32>
      tpu.vector_store %arg5[%c0_22, %c0_23], %31 {strides = array<i32>} : memref<8x1xf32, #tpu.memory_space<vmem>>, vector<8x1xf32>,
    } else {
    }
    return
  }
  func.func @transform_0(%arg0: i32, %arg1: i32) -> (i32, i32) {
    %c0_i32 = arith.constant 0 : i32
    %c0_i32_0 = arith.constant 0 : i32
    return %arg0, %c0_i32 : i32, i32
  }
  func.func @transform_1(%arg0: i32, %arg1: i32) -> (i32, i32) {
    %c0_i32 = arith.constant 0 : i32
    %c0_i32_0 = arith.constant 0 : i32
    return %c0_i32, %arg1 : i32, i32
  }
  func.func @transform_2(%arg0: i32, %arg1: i32) -> (i32, i32) {
    %c0_i32 = arith.constant 0 : i32
    %c0_i32_0 = arith.constant 0 : i32
    return %c0_i32, %arg1 : i32, i32
  }
  func.func @transform_3(%arg0: i32, %arg1: i32) -> (i32, i32) {
    %c0_i32 = arith.constant 0 : i32
    %c0_i32_0 = arith.constant 0 : i32
    return %arg0, %c0_i32 : i32, i32
  }
}

</mosaic_0001>

<llo_original>
// kernel: nll_loss.1
$region0: #{nll_loss.1}
  #allocation0 [shape = 'u32[]', space=smem, size = 0x4, offset = 0x4, fixed_abs, tag = 'smem constant byte address 0x4 - core index']
  #allocation1 [shape = 'u32[72,128]{1,0:T(1,128)}', space=vmem, size = 0x9000, scoped, tag = 'internal scratch']
  #allocation2 [shape = 'f32[8,1]{1,0:T(8,128)}', space=vmem, size = 0x1000, scoped, tag = 'scratch operand']
  #allocation3 [shape = 'f32[8,1]{1,0:T(8,128)}', space=vmem, size = 0x1000, scoped, tag = 'scratch operand']
  %s0 = inlined_call_operand.vmem [shape: bf16[8,32], index: 0, kind: input, shape index: {}]
  %s1 = inlined_call_operand.vmem [shape: bf16[32,128], index: 1, kind: input, shape index: {}]
  %s2 = inlined_call_operand.vmem [shape: f32[1,128], index: 2, kind: input, shape index: {}]
  %s3 = inlined_call_operand.vmem [shape: f32[8,1], index: 3, kind: output, shape index: {}]
  %s4 = sld [smem:[#allocation0]]
  $region30: #{nll_loss.1} parent=0
    _
  %s6 = ssub.s32 1, %s4
  %s7 = scalar_select 0, %s6, %s4
  // Predicated region
  $region2: #{nll_loss.1} parent=0 // pred_check
    _
  $region3: #{nll_loss.1} parent=0 // pred_check_branch
    %9 = sbr.rel (0) target = $region5
  $region4: #{nll_loss.1} parent=0 // pred_region
    _
  $region5: #{nll_loss.1} parent=0 // pred_fallthru
    _
  // Predicated region
  $region6: #{nll_loss.1} parent=0 // pred_check
    _
  $region7: #{nll_loss.1} parent=0 // pred_check_branch
    %11 = sbr.rel (0) target = $region9
  $region8: #{nll_loss.1} parent=0 // pred_region
    _
  $region9: #{nll_loss.1} parent=0 // pred_fallthru
    _
  // Predicated region
  $region10: #{nll_loss.1} parent=0 // pred_check
    _
  $region11: #{nll_loss.1} parent=0 // pred_check_branch
    %13 = sbr.rel (0) target = $region13
  $region12: #{nll_loss.1} parent=0 // pred_region
    _
  $region13: #{nll_loss.1} parent=0 // pred_fallthru
    _
  %p15 = scmp.eq.s32.totalorder 0, 0
  // Predicated region
  $region14: #{nll_loss.1} parent=0 // pred_check
    %p16 = pneg %p15
  $region15: #{nll_loss.1} parent=0 // pred_check_branch
    %18 = sbr.rel (%p16) target = $region17
  $region16: #{nll_loss.1} parent=0 // pred_region
    %vm19 = vcmask 7168
    %20 = vst.msk [vmem:[#allocation2] sm:$0xff] %vm19, -inf
    %21 = vst.msk [vmem:[#allocation3] sm:$0xff] %vm19, 0.0
  $region17: #{nll_loss.1} parent=0 // pred_fallthru
    _
  %v22 = vld [vmem:[%s0] sm:$0xf]
  %v23 = vld [vmem:[%s1] sm:$0xf]
  %v24 = vld [vmem:[%s1 + $0x4] sm:$0xf]
  %v25 = vld [vmem:[%s1 + $0x8] sm:$0xf]
  %v26 = vld [vmem:[%s1 + $0xc] sm:$0xf]
  %v27 = vld [vmem:[%s2] sm:$0x1]
  %v29 = vperm.slane %v27, 0
  %v35 = vunpack.c.l.b16 %v23
  %v36 = vunpack.c.l.b16 %v24
  %v37 = vunpack.c.l.b16 %v25
  %v38 = vunpack.c.l.b16 %v26
  %v39 = vpack.c.b16 %v36, %v35
  %v40 = vpack.c.b16 %v38, %v37
  %vm43 = vcmask 261120
  %v45 = vsel %vm43, %v22, 0
  %47 = vmatpush.bf16.msra.mxu0 0
  %48 = vmatpush.bf16.msra.mxu0 0
  %49 = vmatpush.bf16.msra.mxu0 0
  %50 = vmatpush.bf16.msra.mxu0 0
  %51 = vmatpush.bf16.msra.mxu0 0
  %52 = vmatpush.bf16.msra.mxu0 0
  %53 = vmatpush.bf16.msra.mxu0 %v40
  %54 = vmatpush.bf16.msra.mxu0 %v39
  %55 = vmatmul.bf16.gmra.mxu0 %v45
  %v56 = vpop.f32.mrf.mxu0
  %v57 = vadd.f32 %v29, %v56
  %v58 = vpop.f32.mrf.mxu0
  %59 = vdwg.mxu0
  %v60 = vld [vmem:[#allocation2] sm:$0xff]
  %61 = vmax.xlane.f32.xlu0 %v57
  %v62 = vpop.xlane.xlu0 %61
  %v63 = vmax.f32 %v60, %v62
  %v64 = vld [vmem:[#allocation3] sm:$0xff]
  %v65 = vsub.f32 %v60, %v63
  %v66 = vmul.f32 %v65, 1.442695
  %v67 = vpow.pop %v66
  %v68 = vmul.f32 %v64, %v67
  %70 = vset.pattern.permute.xlu0 0
  %71 = vperm.xlu0 %70, %v63
  %v72 = vpop.permute.xlu0 %71
  %v74 = vsub.f32 %v57, %v72
  %v75 = vmul.f32 %v74, 1.442695
  %v76 = vpow.pop %v75
  %77 = vadd.xlane.f32.xlu0 %v76
  %v78 = vpop.xlane.xlu0 %77
  %v79 = vadd.f32 %v68, %v78
  %vm80 = vcmask 7168
  %81 = vst.msk [vmem:[#allocation3] sm:$0xff] %vm80, %v79
  %82 = vst.msk [vmem:[#allocation2] sm:$0xff] %vm80, %v63
  // Predicated region
  $region18: #{nll_loss.1} parent=0 // pred_check
    %p83 = pneg %p15
  $region19: #{nll_loss.1} parent=0 // pred_check_branch
    %85 = sbr.rel (%p83) target = $region21
  $region20: #{nll_loss.1} parent=0 // pred_region
    %v86 = vld [vmem:[#allocation2] sm:$0xff]
    %v87 = vld [vmem:[#allocation3] sm:$0xff]
    %v88 = vlog2.pop %v87
    %v89 = vmul.f32 %v88, 0.6931472
    %v90 = vadd.f32 %v86, %v89
    %91 = vst.msk [vmem:[%s3] sm:$0xff] %vm80, %v90
  $region21: #{nll_loss.1} parent=0 // pred_fallthru
    _
  // Predicated region
  $region22: #{nll_loss.1} parent=0 // pred_check
    _
  $region23: #{nll_loss.1} parent=0 // pred_check_branch
    %93 = sbr.rel (0) target = $region25
  $region24: #{nll_loss.1} parent=0 // pred_region
    _
  $region25: #{nll_loss.1} parent=0 // pred_fallthru
    _
  // Predicated region
  $region26: #{nll_loss.1} parent=0 // pred_check
    _
  $region27: #{nll_loss.1} parent=0 // pred_check_branch
    %95 = sbr.rel (0) target = $region29
  $region28: #{nll_loss.1} parent=0 // pred_region
    _
  $region29: #{nll_loss.1} parent=0 // pred_fallthru
    _

</llo_original>
